<compile_context>
chip_gen: v5e
topology: v5e:2x2
jax: 0.10.0
libtpu: 0.0.40
codegen_flags: <defaults>
</compile_context>

<pallas_src>
import jax
import jax.numpy as jnp
from jax.experimental import pallas as pl
from jax.experimental.pallas import tpu as pltpu

# ---------------- config (small, consistent with module) ----------------
BATCH = 2
SEQ = 8
HIDDEN = 32
NUM_HEADS = 4
HEAD_DIM = HIDDEN // NUM_HEADS
INTERMEDIATE = 64
LN_EPS = 1e-5  # torch.nn.LayerNorm default

BS = BATCH * SEQ        # 16 rows (batch folded into rows)
LANES = 128             # slab lane width

# row offsets inside the packed bf16 parameter slab (all multiples of 16 -> bf16-tile aligned)
_WQKV_OFF = 0           # (HIDDEN, 3*HIDDEN)        rows   0..31
_WO_OFF = 32            # (HIDDEN, HIDDEN)          rows  32..63
_W1_OFF = 64            # (HIDDEN, INTERMEDIATE)    rows  64..95
_W2_OFF = 96            # (INTERMEDIATE, HIDDEN)    rows  96..159
_BIAS_OFF = 160         # 8 bias / LayerNorm rows   rows 160..175
_MASK_OFF = 176         # (BS, BS) additive mask    rows 176..191
SLAB_ROWS = 192


def _layer_norm(xv, g, b):
    mu = jnp.mean(xv, axis=-1, keepdims=True)
    var = jnp.mean((xv - mu) ** 2, axis=-1, keepdims=True)
    return (xv - mu) * jax.lax.rsqrt(var + LN_EPS) * g + b


def encoder_layer_kernel(x_ref, slab_ref, o_ref):
    f32 = jnp.float32
    bf16 = jnp.bfloat16
    H, FF, H3 = HIDDEN, INTERMEDIATE, 3 * HIDDEN

    x = x_ref[...]                                                     # (BS, H) f32

    # ---- static slices of the single packed parameter slab (bf16) ----
    wqkv = slab_ref[_WQKV_OFF:_WQKV_OFF + H, 0:H3]                     # (H, 3H)
    wo = slab_ref[_WO_OFF:_WO_OFF + H, 0:H]                            # (H, H)
    w1 = slab_ref[_W1_OFF:_W1_OFF + H, 0:FF]                           # (H, FF)
    w2 = slab_ref[_W2_OFF:_W2_OFF + FF, 0:H]                           # (FF, H)
    consts = slab_ref[_BIAS_OFF:_BIAS_OFF + 16, :].astype(f32)         # (16, 128)
    mask = slab_ref[_MASK_OFF:_MASK_OFF + BS, 0:BS].astype(f32)        # (BS, BS) additive mask

    b_qkv = consts[0:1, 0:H3]
    b_1 = consts[1:2, 0:FF]
    b_o = consts[2:3, 0:H]
    ln1_g = consts[3:4, 0:H]
    ln1_b = consts[4:5, 0:H]
    b_2 = consts[5:6, 0:H]
    ln2_g = consts[6:7, 0:H]
    ln2_b = consts[7:8, 0:H]

    # ---- fused QKV projection: one MXU push, bf16 operands, f32 accumulation ----
    # (the softmax 1/sqrt(head_dim) scale was folded into Wq / bq host-side)
    qkv = jnp.dot(x.astype(bf16), wqkv, preferred_element_type=f32) + b_qkv   # (BS, 3H) f32
    qkv_b = qkv.astype(bf16)

    # ---- per-head attention on static lane slices (no sublane/lane concatenations) ----
    dn = (((1,), (1,)), ((), ()))     # contract last dims: (q,d)x(k,d) -> (q,k)
    attn_out = jnp.zeros((BS, H), f32)
    for h in range(NUM_HEADS):        # unrolled: 4 heads, MXU pushes are near-free filler
        lo = h * HEAD_DIM
        q_h = qkv_b[:, lo:lo + HEAD_DIM]                               # (BS, HD)
        k_h = qkv_b[:, H + lo:H + lo + HEAD_DIM]
        v_h = qkv_b[:, 2 * H + lo:2 * H + lo + HEAD_DIM]

        s = jax.lax.dot_general(q_h, k_h, dn, preferred_element_type=f32) + mask   # (BS, BS)
        m = jnp.max(s, axis=-1, keepdims=True)
        p = jnp.exp(s - m)                       # masked entries underflow to exactly 0
        denom = jnp.sum(p, axis=-1, keepdims=True)
        a = p * pl.reciprocal(denom, approx=True)                      # EUP slot (near-free)
        ctx_h = jnp.dot(a.astype(bf16), v_h, preferred_element_type=f32)           # (BS, HD)
        # fold the output projection per head: avoids re-concatenating ctx along lanes
        attn_out = attn_out + jnp.dot(ctx_h.astype(bf16), wo[lo:lo + HEAD_DIM, :],
                                      preferred_element_type=f32)
    attn_out = attn_out + b_o

    # TODO(synk): nn.Dropout(0.1) is treated as identity (inference/eval semantics).
    h1 = _layer_norm(x + attn_out, ln1_g, ln1_b)

    # ---- feed-forward ----
    ff_h = jnp.maximum(jnp.dot(h1.astype(bf16), w1, preferred_element_type=f32) + b_1, 0.0)
    ff = jnp.dot(ff_h.astype(bf16), w2, preferred_element_type=f32) + b_2
    out = _layer_norm(h1 + ff, ln2_g, ln2_b)

    o_ref[...] = out.astype(o_ref.dtype)


# ---------------- host-side parameter fusion / packing (free, outside the kernel) ----------------
def pack_params(params):
    H, FF, H3 = HIDDEN, INTERMEDIATE, 3 * HIDDEN
    inv_sqrt_d = 1.0 / (HEAD_DIM ** 0.5)

    # fold softmax scale into the Q projection (mathematically identical)
    wq = params["wq"] * inv_sqrt_d
    bq = params["bq"] * inv_sqrt_d

    # PyTorch Linear weight is (out, in); store W.T so the kernel computes x @ W.T directly
    wqkv_t = jnp.concatenate([wq, params["wk"], params["wv"]], axis=0).T      # (H, 3H)
    wo_t = params["wo"].T                                                     # (H, H)
    w1_t = params["w1"].T                                                     # (H, FF)
    w2_t = params["w2"].T                                                     # (FF, H)

    def pad(a, rows):
        return jnp.pad(a, ((0, rows - a.shape[0]), (0, LANES - a.shape[1])))

    b_qkv = jnp.concatenate([bq, params["bk"], params["bv"]], axis=1)         # (1, 3H)
    bias_rows = jnp.concatenate([
        pad(b_qkv, 1),            # row 0
        pad(params["b1"], 1),     # row 1
        pad(params["bo"], 1),     # row 2
        pad(params["ln1_g"], 1),  # row 3
        pad(params["ln1_b"], 1),  # row 4
        pad(params["b2"], 1),     # row 5
        pad(params["ln2_g"], 1),  # row 6
        pad(params["ln2_b"], 1),  # row 7
    ], axis=0)                                                                # (8, 128)

    # block-diagonal additive mask: rows/cols in the same batch block attend, others get -1e30
    r = jnp.arange(BS)
    same_batch = (r[:, None] // SEQ) == (r[None, :] // SEQ)
    mask = jnp.where(same_batch, 0.0, -1e30).astype(jnp.float32)              # (BS, BS)

    slab = jnp.concatenate([
        pad(wqkv_t, 32),          # rows   0..31
        pad(wo_t, 32),            # rows  32..63
        pad(w1_t, 32),            # rows  64..95
        pad(w2_t, 64),            # rows  96..159
        pad(bias_rows, 16),       # rows 160..175
        pad(mask, 16),            # rows 176..191
    ], axis=0).astype(jnp.bfloat16)                                           # (192, 128) bf16
    assert slab.shape == (SLAB_ROWS, LANES)
    return slab


def transformer_encoder_layer(x, params):
    B, S, H = x.shape
    slab = pack_params(params)
    x2 = x.reshape(B * S, H)     # fold batch into rows (free, outside the kernel)

    out2 = pl.pallas_call(
        encoder_layer_kernel,
        out_shape=jax.ShapeDtypeStruct((B * S, H), x.dtype),
        # no grid: single invocation, whole arrays resident in VMEM (single-buffered,
        # no pipeline bookkeeping).  Total footprint ~50 KiB — trivially fits v5e/v6e/v7x VMEM.
        in_specs=[
            pl.BlockSpec(memory_space=pltpu.MemorySpace.VMEM),   # x
            pl.BlockSpec(memory_space=pltpu.MemorySpace.VMEM),   # packed parameter slab
        ],
        out_specs=pl.BlockSpec(memory_space=pltpu.MemorySpace.VMEM),
    )(x2, slab)

    return out2.reshape(B, S, H)


# ---------------- deterministic parameter init ----------------
def init_params(key):
    ks = jax.random.split(key, 8)
    scale = 0.02

    def w(k, shape):
        return (scale * jax.random.normal(k, shape)).astype(jnp.float32)

    params = {
        # attention projections: PyTorch Linear weight shape (out, in)
        "wq": w(ks[0], (HIDDEN, HIDDEN)), "bq": jnp.zeros((1, HIDDEN), jnp.float32),
        "wk": w(ks[1], (HIDDEN, HIDDEN)), "bk": jnp.zeros((1, HIDDEN), jnp.float32),
        "wv": w(ks[2], (HIDDEN, HIDDEN)), "bv": jnp.zeros((1, HIDDEN), jnp.float32),
        "wo": w(ks[3], (HIDDEN, HIDDEN)), "bo": jnp.zeros((1, HIDDEN), jnp.float32),
        # layer norms
        "ln1_g": jnp.ones((1, HIDDEN), jnp.float32), "ln1_b": jnp.zeros((1, HIDDEN), jnp.float32),
        "ln2_g": jnp.ones((1, HIDDEN), jnp.float32), "ln2_b": jnp.zeros((1, HIDDEN), jnp.float32),
        # feed-forward
        "w1": w(ks[4], (INTERMEDIATE, HIDDEN)), "b1": jnp.zeros((1, INTERMEDIATE), jnp.float32),
        "w2": w(ks[5], (HIDDEN, INTERMEDIATE)), "b2": jnp.zeros((1, HIDDEN), jnp.float32),
    }
    # give biases small nonzero values so they are exercised
    params["bq"] = w(ks[6], (1, HIDDEN))
    params["b1"] = w(ks[7], (1, INTERMEDIATE))
    return params


# ---------------- pure-JAX reference (f32, for sanity check) ----------------
def reference(x, p):
    def lin(v, w, b):
        return v @ w.T + b[0]

    def ln(v, g, b):
        mu = v.mean(-1, keepdims=True)
        var = ((v - mu) ** 2).mean(-1, keepdims=True)
        return (v - mu) / jnp.sqrt(var + LN_EPS) * g[0] + b[0]

    B, S, H = x.shape
    q = lin(x, p["wq"], p["bq"]).reshape(B, S, NUM_HEADS, HEAD_DIM).transpose(0, 2, 1, 3)
    k = lin(x, p["wk"], p["bk"]).reshape(B, S, NUM_HEADS, HEAD_DIM).transpose(0, 2, 1, 3)
    v = lin(x, p["wv"], p["bv"]).reshape(B, S, NUM_HEADS, HEAD_DIM).transpose(0, 2, 1, 3)
    s = jnp.einsum("bhqd,bhkd->bhqk", q, k) / (HEAD_DIM ** 0.5)
    a = jax.nn.softmax(s, axis=-1)
    ctx = jnp.einsum("bhqk,bhkd->bhqd", a, v).transpose(0, 2, 1, 3).reshape(B, S, H)
    attn_out = lin(ctx, p["wo"], p["bo"])
    h1 = ln(x + attn_out, p["ln1_g"], p["ln1_b"])
    ff = lin(jnp.maximum(lin(h1, p["w1"], p["b1"]), 0.0), p["w2"], p["b2"])
    return ln(h1 + ff, p["ln2_g"], p["ln2_b"])


if __name__ == "__main__":
    key = jax.random.PRNGKey(0)
    kx, kp = jax.random.split(key)
    x = jax.random.normal(kx, (BATCH, SEQ, HIDDEN), dtype=jnp.float32)
    params = init_params(kp)

    out = transformer_encoder_layer(x, params)
    out = jax.block_until_ready(out)

    ref = reference(x, params)
    assert out.shape == (BATCH, SEQ, HIDDEN)
    # tolerance covers bf16 MXU operands (weights + activation casts) and the approximate
    # EUP reciprocal used for softmax normalization; reference is exact f32
    assert jnp.allclose(out, ref, atol=1e-2, rtol=1e-2), "mismatch vs reference"

    print("KERNEL_OK")
</pallas_src>

<mosaic_0001>
module attributes {stable_mosaic.version = 11 : i64} {
  func.func @encoder_layer_kernel(%arg0: memref<16x32xf32, #tpu.memory_space<vmem>>, %arg1: memref<192x128xbf16, #tpu.memory_space<vmem>>, %arg2: memref<16x32xf32, #tpu.memory_space<vmem>>) attributes {dimension_semantics = [], scalar_prefetch = 0 : i64, scratch_operands = 0 : i64, tpu.core_type = #tpu.core_type<tc>} {
    %c0 = arith.constant 0 : index
    %c0_0 = arith.constant 0 : index
    %0 = vector.load %arg0[%c0, %c0_0] : memref<16x32xf32, #tpu.memory_space<vmem>>, vector<16x32xf32>
    %c0_1 = arith.constant 0 : index
    %c0_2 = arith.constant 0 : index
    %1 = vector.load %arg1[%c0_1, %c0_2] : memref<192x128xbf16, #tpu.memory_space<vmem>>, vector<32x96xbf16>
    %c32 = arith.constant 32 : index
    %c0_3 = arith.constant 0 : index
    %2 = vector.load %arg1[%c32, %c0_3] : memref<192x128xbf16, #tpu.memory_space<vmem>>, vector<32x32xbf16>
    %c64 = arith.constant 64 : index
    %c0_4 = arith.constant 0 : index
    %3 = vector.load %arg1[%c64, %c0_4] : memref<192x128xbf16, #tpu.memory_space<vmem>>, vector<32x64xbf16>
    %c96 = arith.constant 96 : index
    %c0_5 = arith.constant 0 : index
    %4 = vector.load %arg1[%c96, %c0_5] : memref<192x128xbf16, #tpu.memory_space<vmem>>, vector<64x32xbf16>
    %c160 = arith.constant 160 : index
    %c0_6 = arith.constant 0 : index
    %5 = vector.load %arg1[%c160, %c0_6] : memref<192x128xbf16, #tpu.memory_space<vmem>>, vector<16x128xbf16>
    %6 = arith.extf %5 : vector<16x128xbf16> to vector<16x128xf32>
    %c176 = arith.constant 176 : index
    %c0_7 = arith.constant 0 : index
    %7 = vector.load %arg1[%c176, %c0_7] : memref<192x128xbf16, #tpu.memory_space<vmem>>, vector<16x16xbf16>
    %8 = arith.extf %7 : vector<16x16xbf16> to vector<16x16xf32>
    %9 = vector.extract_strided_slice %6 {offsets = [0, 0], sizes = [1, 96], strides = [1, 1]} : vector<16x128xf32> to vector<1x96xf32>
    %10 = vector.extract_strided_slice %6 {offsets = [1, 0], sizes = [1, 64], strides = [1, 1]} : vector<16x128xf32> to vector<1x64xf32>
    %11 = vector.extract_strided_slice %6 {offsets = [2, 0], sizes = [1, 32], strides = [1, 1]} : vector<16x128xf32> to vector<1x32xf32>
    %12 = vector.extract_strided_slice %6 {offsets = [3, 0], sizes = [1, 32], strides = [1, 1]} : vector<16x128xf32> to vector<1x32xf32>
    %13 = vector.extract_strided_slice %6 {offsets = [4, 0], sizes = [1, 32], strides = [1, 1]} : vector<16x128xf32> to vector<1x32xf32>
    %14 = vector.extract_strided_slice %6 {offsets = [5, 0], sizes = [1, 32], strides = [1, 1]} : vector<16x128xf32> to vector<1x32xf32>
    %15 = vector.extract_strided_slice %6 {offsets = [6, 0], sizes = [1, 32], strides = [1, 1]} : vector<16x128xf32> to vector<1x32xf32>
    %16 = vector.extract_strided_slice %6 {offsets = [7, 0], sizes = [1, 32], strides = [1, 1]} : vector<16x128xf32> to vector<1x32xf32>
    %17 = arith.truncf %0 : vector<16x32xf32> to vector<16x32xbf16>
    %cst = arith.constant dense<0.000000e+00> : vector<16x96xf32>
    %18 = tpu.matmul %17, %1, %cst {dimension_numbers = #tpu.dot_dimension_numbers<[1], [0], [0], [1], [0, 0, 1, 1], [], []>} : vector<16x32xbf16>, vector<32x96xbf16>, vector<16x96xf32> -> vector<16x96xf32>
    %19 = vector.broadcast %9 : vector<1x96xf32> to vector<16x96xf32>
    %20 = arith.addf %18, %19 : vector<16x96xf32>
    %21 = arith.truncf %20 : vector<16x96xf32> to vector<16x96xbf16>
    %cst_8 = arith.constant 0.000000e+00 : f32
    %22 = vector.broadcast %cst_8 : f32 to vector<16x32xf32>
    %23 = vector.extract_strided_slice %21 {offsets = [0, 0], sizes = [16, 8], strides = [1, 1]} : vector<16x96xbf16> to vector<16x8xbf16>
    %24 = vector.extract_strided_slice %21 {offsets = [0, 32], sizes = [16, 8], strides = [1, 1]} : vector<16x96xbf16> to vector<16x8xbf16>
    %25 = vector.extract_strided_slice %21 {offsets = [0, 64], sizes = [16, 8], strides = [1, 1]} : vector<16x96xbf16> to vector<16x8xbf16>
    %cst_9 = arith.constant dense<0.000000e+00> : vector<16x16xf32>
    %26 = tpu.matmul %23, %24, %cst_9 {dimension_numbers = #tpu.dot_dimension_numbers<[1], [1], [0], [0], [0, 0, 1, 0], [], []>} : vector<16x8xbf16>, vector<16x8xbf16>, vector<16x16xf32> -> vector<16x16xf32>
    %27 = arith.addf %26, %8 : vector<16x16xf32>
    %cst_10 = arith.constant dense<0xFF800000> : vector<16xf32>
    %28 = vector.multi_reduction <maximumf>, %27, %cst_10 [1] : vector<16x16xf32> to vector<16xf32>
    %29 = vector.shape_cast %28 : vector<16xf32> to vector<16x1xf32>
    %30 = vector.broadcast %29 : vector<16x1xf32> to vector<16x16xf32>
    %31 = arith.subf %27, %30 : vector<16x16xf32>
    %32 = math.exp %31 : vector<16x16xf32>
    %cst_11 = arith.constant dense<0.000000e+00> : vector<16xf32>
    %33 = vector.multi_reduction <add>, %32, %cst_11 [1] : vector<16x16xf32> to vector<16xf32>
    %34 = vector.shape_cast %33 : vector<16xf32> to vector<16x1xf32>
    %35 = tpu.reciprocal %34 {approx = true} : vector<16x1xf32> -> vector<16x1xf32>
    %36 = vector.broadcast %35 : vector<16x1xf32> to vector<16x16xf32>
    %37 = arith.mulf %32, %36 : vector<16x16xf32>
    %38 = arith.truncf %37 : vector<16x16xf32> to vector<16x16xbf16>
    %cst_12 = arith.constant dense<0.000000e+00> : vector<16x8xf32>
    %39 = tpu.matmul %38, %25, %cst_12 {dimension_numbers = #tpu.dot_dimension_numbers<[1], [0], [0], [1], [0, 0, 1, 1], [], []>} : vector<16x16xbf16>, vector<16x8xbf16>, vector<16x8xf32> -> vector<16x8xf32>
    %40 = arith.truncf %39 : vector<16x8xf32> to vector<16x8xbf16>
    %41 = vector.extract_strided_slice %2 {offsets = [0, 0], sizes = [8, 32], strides = [1, 1]} : vector<32x32xbf16> to vector<8x32xbf16>
    %cst_13 = arith.constant dense<0.000000e+00> : vector<16x32xf32>
    %42 = tpu.matmul %40, %41, %cst_13 {dimension_numbers = #tpu.dot_dimension_numbers<[1], [0], [0], [1], [0, 0, 1, 1], [], []>} : vector<16x8xbf16>, vector<8x32xbf16>, vector<16x32xf32> -> vector<16x32xf32>
    %43 = arith.addf %22, %42 : vector<16x32xf32>
    %44 = vector.extract_strided_slice %21 {offsets = [0, 8], sizes = [16, 8], strides = [1, 1]} : vector<16x96xbf16> to vector<16x8xbf16>
    %45 = vector.extract_strided_slice %21 {offsets = [0, 40], sizes = [16, 8], strides = [1, 1]} : vector<16x96xbf16> to vector<16x8xbf16>
    %46 = vector.extract_strided_slice %21 {offsets = [0, 72], sizes = [16, 8], strides = [1, 1]} : vector<16x96xbf16> to vector<16x8xbf16>
    %cst_14 = arith.constant dense<0.000000e+00> : vector<16x16xf32>
    %47 = tpu.matmul %44, %45, %cst_14 {dimension_numbers = #tpu.dot_dimension_numbers<[1], [1], [0], [0], [0, 0, 1, 0], [], []>} : vector<16x8xbf16>, vector<16x8xbf16>, vector<16x16xf32> -> vector<16x16xf32>
    %48 = arith.addf %47, %8 : vector<16x16xf32>
    %cst_15 = arith.constant dense<0xFF800000> : vector<16xf32>
    %49 = vector.multi_reduction <maximumf>, %48, %cst_15 [1] : vector<16x16xf32> to vector<16xf32>
    %50 = vector.shape_cast %49 : vector<16xf32> to vector<16x1xf32>
    %51 = vector.broadcast %50 : vector<16x1xf32> to vector<16x16xf32>
    %52 = arith.subf %48, %51 : vector<16x16xf32>
    %53 = math.exp %52 : vector<16x16xf32>
    %cst_16 = arith.constant dense<0.000000e+00> : vector<16xf32>
    %54 = vector.multi_reduction <add>, %53, %cst_16 [1] : vector<16x16xf32> to vector<16xf32>
    %55 = vector.shape_cast %54 : vector<16xf32> to vector<16x1xf32>
    %56 = tpu.reciprocal %55 {approx = true} : vector<16x1xf32> -> vector<16x1xf32>
    %57 = vector.broadcast %56 : vector<16x1xf32> to vector<16x16xf32>
    %58 = arith.mulf %53, %57 : vector<16x16xf32>
    %59 = arith.truncf %58 : vector<16x16xf32> to vector<16x16xbf16>
    %cst_17 = arith.constant dense<0.000000e+00> : vector<16x8xf32>
    %60 = tpu.matmul %59, %46, %cst_17 {dimension_numbers = #tpu.dot_dimension_numbers<[1], [0], [0], [1], [0, 0, 1, 1], [], []>} : vector<16x16xbf16>, vector<16x8xbf16>, vector<16x8xf32> -> vector<16x8xf32>
    %61 = arith.truncf %60 : vector<16x8xf32> to vector<16x8xbf16>
    %62 = vector.extract_strided_slice %2 {offsets = [8, 0], sizes = [8, 32], strides = [1, 1]} : vector<32x32xbf16> to vector<8x32xbf16>
    %cst_18 = arith.constant dense<0.000000e+00> : vector<16x32xf32>
    %63 = tpu.matmul %61, %62, %cst_18 {dimension_numbers = #tpu.dot_dimension_numbers<[1], [0], [0], [1], [0, 0, 1, 1], [], []>} : vector<16x8xbf16>, vector<8x32xbf16>, vector<16x32xf32> -> vector<16x32xf32>
    %64 = arith.addf %43, %63 : vector<16x32xf32>
    %65 = vector.extract_strided_slice %21 {offsets = [0, 16], sizes = [16, 8], strides = [1, 1]} : vector<16x96xbf16> to vector<16x8xbf16>
    %66 = vector.extract_strided_slice %21 {offsets = [0, 48], sizes = [16, 8], strides = [1, 1]} : vector<16x96xbf16> to vector<16x8xbf16>
    %67 = vector.extract_strided_slice %21 {offsets = [0, 80], sizes = [16, 8], strides = [1, 1]} : vector<16x96xbf16> to vector<16x8xbf16>
    %cst_19 = arith.constant dense<0.000000e+00> : vector<16x16xf32>
    %68 = tpu.matmul %65, %66, %cst_19 {dimension_numbers = #tpu.dot_dimension_numbers<[1], [1], [0], [0], [0, 0, 1, 0], [], []>} : vector<16x8xbf16>, vector<16x8xbf16>, vector<16x16xf32> -> vector<16x16xf32>
    %69 = arith.addf %68, %8 : vector<16x16xf32>
    %cst_20 = arith.constant dense<0xFF800000> : vector<16xf32>
    %70 = vector.multi_reduction <maximumf>, %69, %cst_20 [1] : vector<16x16xf32> to vector<16xf32>
    %71 = vector.shape_cast %70 : vector<16xf32> to vector<16x1xf32>
    %72 = vector.broadcast %71 : vector<16x1xf32> to vector<16x16xf32>
    %73 = arith.subf %69, %72 : vector<16x16xf32>
    %74 = math.exp %73 : vector<16x16xf32>
    %cst_21 = arith.constant dense<0.000000e+00> : vector<16xf32>
    %75 = vector.multi_reduction <add>, %74, %cst_21 [1] : vector<16x16xf32> to vector<16xf32>
    %76 = vector.shape_cast %75 : vector<16xf32> to vector<16x1xf32>
    %77 = tpu.reciprocal %76 {approx = true} : vector<16x1xf32> -> vector<16x1xf32>
    %78 = vector.broadcast %77 : vector<16x1xf32> to vector<16x16xf32>
    %79 = arith.mulf %74, %78 : vector<16x16xf32>
    %80 = arith.truncf %79 : vector<16x16xf32> to vector<16x16xbf16>
    %cst_22 = arith.constant dense<0.000000e+00> : vector<16x8xf32>
    %81 = tpu.matmul %80, %67, %cst_22 {dimension_numbers = #tpu.dot_dimension_numbers<[1], [0], [0], [1], [0, 0, 1, 1], [], []>} : vector<16x16xbf16>, vector<16x8xbf16>, vector<16x8xf32> -> vector<16x8xf32>
    %82 = arith.truncf %81 : vector<16x8xf32> to vector<16x8xbf16>
    %83 = vector.extract_strided_slice %2 {offsets = [16, 0], sizes = [8, 32], strides = [1, 1]} : vector<32x32xbf16> to vector<8x32xbf16>
    %cst_23 = arith.constant dense<0.000000e+00> : vector<16x32xf32>
    %84 = tpu.matmul %82, %83, %cst_23 {dimension_numbers = #tpu.dot_dimension_numbers<[1], [0], [0], [1], [0, 0, 1, 1], [], []>} : vector<16x8xbf16>, vector<8x32xbf16>, vector<16x32xf32> -> vector<16x32xf32>
    %85 = arith.addf %64, %84 : vector<16x32xf32>
    %86 = vector.extract_strided_slice %21 {offsets = [0, 24], sizes = [16, 8], strides = [1, 1]} : vector<16x96xbf16> to vector<16x8xbf16>
    %87 = vector.extract_strided_slice %21 {offsets = [0, 56], sizes = [16, 8], strides = [1, 1]} : vector<16x96xbf16> to vector<16x8xbf16>
    %88 = vector.extract_strided_slice %21 {offsets = [0, 88], sizes = [16, 8], strides = [1, 1]} : vector<16x96xbf16> to vector<16x8xbf16>
    %cst_24 = arith.constant dense<0.000000e+00> : vector<16x16xf32>
    %89 = tpu.matmul %86, %87, %cst_24 {dimension_numbers = #tpu.dot_dimension_numbers<[1], [1], [0], [0], [0, 0, 1, 0], [], []>} : vector<16x8xbf16>, vector<16x8xbf16>, vector<16x16xf32> -> vector<16x16xf32>
    %90 = arith.addf %89, %8 : vector<16x16xf32>
    %cst_25 = arith.constant dense<0xFF800000> : vector<16xf32>
    %91 = vector.multi_reduction <maximumf>, %90, %cst_25 [1] : vector<16x16xf32> to vector<16xf32>
    %92 = vector.shape_cast %91 : vector<16xf32> to vector<16x1xf32>
    %93 = vector.broadcast %92 : vector<16x1xf32> to vector<16x16xf32>
    %94 = arith.subf %90, %93 : vector<16x16xf32>
    %95 = math.exp %94 : vector<16x16xf32>
    %cst_26 = arith.constant dense<0.000000e+00> : vector<16xf32>
    %96 = vector.multi_reduction <add>, %95, %cst_26 [1] : vector<16x16xf32> to vector<16xf32>
    %97 = vector.shape_cast %96 : vector<16xf32> to vector<16x1xf32>
    %98 = tpu.reciprocal %97 {approx = true} : vector<16x1xf32> -> vector<16x1xf32>
    %99 = vector.broadcast %98 : vector<16x1xf32> to vector<16x16xf32>
    %100 = arith.mulf %95, %99 : vector<16x16xf32>
    %101 = arith.truncf %100 : vector<16x16xf32> to vector<16x16xbf16>
    %cst_27 = arith.constant dense<0.000000e+00> : vector<16x8xf32>
    %102 = tpu.matmul %101, %88, %cst_27 {dimension_numbers = #tpu.dot_dimension_numbers<[1], [0], [0], [1], [0, 0, 1, 1], [], []>} : vector<16x16xbf16>, vector<16x8xbf16>, vector<16x8xf32> -> vector<16x8xf32>
    %103 = arith.truncf %102 : vector<16x8xf32> to vector<16x8xbf16>
    %104 = vector.extract_strided_slice %2 {offsets = [24, 0], sizes = [8, 32], strides = [1, 1]} : vector<32x32xbf16> to vector<8x32xbf16>
    %cst_28 = arith.constant dense<0.000000e+00> : vector<16x32xf32>
    %105 = tpu.matmul %103, %104, %cst_28 {dimension_numbers = #tpu.dot_dimension_numbers<[1], [0], [0], [1], [0, 0, 1, 1], [], []>} : vector<16x8xbf16>, vector<8x32xbf16>, vector<16x32xf32> -> vector<16x32xf32>
    %106 = arith.addf %85, %105 : vector<16x32xf32>
    %107 = vector.broadcast %11 : vector<1x32xf32> to vector<16x32xf32>
    %108 = arith.addf %106, %107 : vector<16x32xf32>
    %109 = arith.addf %0, %108 : vector<16x32xf32>
    %cst_29 = arith.constant dense<0.000000e+00> : vector<16xf32>
    %110 = vector.multi_reduction <add>, %109, %cst_29 [1] : vector<16x32xf32> to vector<16xf32>
    %111 = vector.shape_cast %110 : vector<16xf32> to vector<16x1xf32>
    %cst_30 = arith.constant 3.200000e+01 : f32
    %112 = vector.broadcast %cst_30 : f32 to vector<16x1xf32>
    %113 = arith.divf %111, %112 : vector<16x1xf32>
    %114 = vector.broadcast %113 : vector<16x1xf32> to vector<16x32xf32>
    %115 = arith.subf %109, %114 : vector<16x32xf32>
    %116 = arith.mulf %115, %115 : vector<16x32xf32>
    %cst_31 = arith.constant dense<0.000000e+00> : vector<16xf32>
    %117 = vector.multi_reduction <add>, %116, %cst_31 [1] : vector<16x32xf32> to vector<16xf32>
    %118 = vector.shape_cast %117 : vector<16xf32> to vector<16x1xf32>
    %cst_32 = arith.constant 3.200000e+01 : f32
    %119 = vector.broadcast %cst_32 : f32 to vector<16x1xf32>
    %120 = arith.divf %118, %119 : vector<16x1xf32>
    %121 = vector.broadcast %113 : vector<16x1xf32> to vector<16x32xf32>
    %122 = arith.subf %109, %121 : vector<16x32xf32>
    %cst_33 = arith.constant 9.99999974E-6 : f32
    %123 = vector.broadcast %cst_33 : f32 to vector<16x1xf32>
    %124 = arith.addf %120, %123 : vector<16x1xf32>
    %125 = math.rsqrt %124 : vector<16x1xf32>
    %126 = vector.broadcast %125 : vector<16x1xf32> to vector<16x32xf32>
    %127 = arith.mulf %122, %126 : vector<16x32xf32>
    %128 = vector.broadcast %12 : vector<1x32xf32> to vector<16x32xf32>
    %129 = arith.mulf %127, %128 : vector<16x32xf32>
    %130 = vector.broadcast %13 : vector<1x32xf32> to vector<16x32xf32>
    %131 = arith.addf %129, %130 : vector<16x32xf32>
    %132 = arith.truncf %131 : vector<16x32xf32> to vector<16x32xbf16>
    %cst_34 = arith.constant dense<0.000000e+00> : vector<16x64xf32>
    %133 = tpu.matmul %132, %3, %cst_34 {dimension_numbers = #tpu.dot_dimension_numbers<[1], [0], [0], [1], [0, 0, 1, 1], [], []>} : vector<16x32xbf16>, vector<32x64xbf16>, vector<16x64xf32> -> vector<16x64xf32>
    %134 = vector.broadcast %10 : vector<1x64xf32> to vector<16x64xf32>
    %135 = arith.addf %133, %134 : vector<16x64xf32>
    %cst_35 = arith.constant 0.000000e+00 : f32
    %136 = vector.broadcast %cst_35 : f32 to vector<16x64xf32>
    %137 = arith.maximumf %135, %136 : vector<16x64xf32>
    %138 = arith.truncf %137 : vector<16x64xf32> to vector<16x64xbf16>
    %cst_36 = arith.constant dense<0.000000e+00> : vector<16x32xf32>
    %139 = tpu.matmul %138, %4, %cst_36 {dimension_numbers = #tpu.dot_dimension_numbers<[1], [0], [0], [1], [0, 0, 1, 1], [], []>} : vector<16x64xbf16>, vector<64x32xbf16>, vector<16x32xf32> -> vector<16x32xf32>
    %140 = vector.broadcast %14 : vector<1x32xf32> to vector<16x32xf32>
    %141 = arith.addf %139, %140 : vector<16x32xf32>
    %142 = arith.addf %131, %141 : vector<16x32xf32>
    %cst_37 = arith.constant dense<0.000000e+00> : vector<16xf32>
    %143 = vector.multi_reduction <add>, %142, %cst_37 [1] : vector<16x32xf32> to vector<16xf32>
    %144 = vector.shape_cast %143 : vector<16xf32> to vector<16x1xf32>
    %cst_38 = arith.constant 3.200000e+01 : f32
    %145 = vector.broadcast %cst_38 : f32 to vector<16x1xf32>
    %146 = arith.divf %144, %145 : vector<16x1xf32>
    %147 = vector.broadcast %146 : vector<16x1xf32> to vector<16x32xf32>
    %148 = arith.subf %142, %147 : vector<16x32xf32>
    %149 = arith.mulf %148, %148 : vector<16x32xf32>
    %cst_39 = arith.constant dense<0.000000e+00> : vector<16xf32>
    %150 = vector.multi_reduction <add>, %149, %cst_39 [1] : vector<16x32xf32> to vector<16xf32>
    %151 = vector.shape_cast %150 : vector<16xf32> to vector<16x1xf32>
    %cst_40 = arith.constant 3.200000e+01 : f32
    %152 = vector.broadcast %cst_40 : f32 to vector<16x1xf32>
    %153 = arith.divf %151, %152 : vector<16x1xf32>
    %154 = vector.broadcast %146 : vector<16x1xf32> to vector<16x32xf32>
    %155 = arith.subf %142, %154 : vector<16x32xf32>
    %cst_41 = arith.constant 9.99999974E-6 : f32
    %156 = vector.broadcast %cst_41 : f32 to vector<16x1xf32>
    %157 = arith.addf %153, %156 : vector<16x1xf32>
    %158 = math.rsqrt %157 : vector<16x1xf32>
    %159 = vector.broadcast %158 : vector<16x1xf32> to vector<16x32xf32>
    %160 = arith.mulf %155, %159 : vector<16x32xf32>
    %161 = vector.broadcast %15 : vector<1x32xf32> to vector<16x32xf32>
    %162 = arith.mulf %160, %161 : vector<16x32xf32>
    %163 = vector.broadcast %16 : vector<1x32xf32> to vector<16x32xf32>
    %164 = arith.addf %162, %163 : vector<16x32xf32>
    %c0_42 = arith.constant 0 : index
    %c0_43 = arith.constant 0 : index
    %165 = vector.load %arg2[%c0_42, %c0_43] : memref<16x32xf32, #tpu.memory_space<vmem>>, vector<16x32xf32>
    tpu.vector_store %arg2[%c0_42, %c0_43], %164 {strides = array<i32>} : memref<16x32xf32, #tpu.memory_space<vmem>>, vector<16x32xf32>,
    return
  }
}

</mosaic_0001>

<llo_original>
// kernel: tpu_custom_call.1
$region0: #{tpu_custom_call.1}
  #allocation0 [shape = 'u32[]', space=smem, size = 0x4, offset = 0x4, fixed_abs, tag = 'smem constant byte address 0x4 - core index']
  #allocation1 [shape = 'u32[72,128]{1,0:T(1,128)}', space=vmem, size = 0x9000, scoped, tag = 'internal scratch']
  %s0 = inlined_call_operand.hbm [shape: f32[16,32], index: 0, kind: input, shape index: {}]
  %s1 = inlined_call_operand.hbm [shape: bf16[192,128], index: 1, kind: input, shape index: {}]
  %s2 = inlined_call_operand.hbm [shape: f32[16,32], index: 2, kind: output, shape index: {}]
  %s3 = sld [smem:[#allocation0]]
  $region26: #{tpu_custom_call.1} parent=0
    _
  %s5 = ssub.s32 1, %s3
  %s6 = scalar_select 0, %s5, %s3
  $region1: #{tpu_custom_call.1} parent=0
    #allocation2 [shape = 'u8[8192]{0}', space=vmem, size = 0x2000, scoped, tag = 'input window, operand 0, single buffered']
    #allocation3 [shape = 's32[1]{0}', space=sflag, size = 0x4, scoped, tag = 'scoped memory for tpu_custom_call.1']
    #allocation4 [shape = 's32[1]{0}', space=sflag, size = 0x4, scoped, tag = 'scoped memory for tpu_custom_call.1']
    #allocation5 [shape = 'u8[49152]{0}', space=vmem, size = 0xc000, scoped, tag = 'input window, operand 1, single buffered']
    #allocation6 [shape = 's32[1]{0}', space=sflag, size = 0x4, scoped, tag = 'scoped memory for tpu_custom_call.1']
    #allocation7 [shape = 'u8[8192]{0}', space=vmem, size = 0x2000, scoped, tag = 'output window, operand 0, single buffered']
    %7 = vsyncpa [#allocation3], 0
    %8 = vsyncpa [#allocation6], 0
    %9 = vsyncpa [#allocation4], 0
    // Predicated region
    $region2: #{tpu_custom_call.1} parent=1 // pred_check
      _
    $region3: #{tpu_custom_call.1} parent=1 // pred_check_branch
      %11 = sbr.rel (0) target = $region5
    $region4: #{tpu_custom_call.1} parent=1 // pred_region
      %13 = vsyncadd [#allocation3], 0
      %s14 = sshll.u32 %s0, 4
      %s15 = int_to_ptr.hbm [resolvable:$true] %s14
      %s16 = sshll.u32 [#allocation2], 4
      %s17 = int_to_ptr.vmem [resolvable:$true] %s16
      %22 = dma.hbm_to_vmem [thread:$0]  %s15, 256, %s17, [#allocation3], 128, 128, 8
    $region5: #{tpu_custom_call.1} parent=1 // pred_fallthru
      _
    // Predicated region
    $region6: #{tpu_custom_call.1} parent=1 // pred_check
      _
    $region7: #{tpu_custom_call.1} parent=1 // pred_check_branch
      %24 = sbr.rel (0) target = $region9
    $region8: #{tpu_custom_call.1} parent=1 // pred_region
      %26 = vsyncadd [#allocation6], 0
      %s27 = sshll.u32 %s1, 4
      %s28 = int_to_ptr.hbm [resolvable:$true] %s27
      %s29 = sshll.u32 [#allocation5], 4
      %s30 = int_to_ptr.vmem [resolvable:$true] %s29
      %35 = dma.hbm_to_vmem [thread:$0]  %s28, 1536, %s30, [#allocation6], 64, 64, 4
    $region9: #{tpu_custom_call.1} parent=1 // pred_fallthru
      _
    // Predicated region
    $region10: #{tpu_custom_call.1} parent=1 // pred_check
      _
    $region11: #{tpu_custom_call.1} parent=1 // pred_check_branch
      %37 = sbr.rel (0) target = $region13
    $region12: #{tpu_custom_call.1} parent=1 // pred_region
      %39 = dma.done [#allocation3], 256
    $region13: #{tpu_custom_call.1} parent=1 // pred_fallthru
      _
    // Predicated region
    $region14: #{tpu_custom_call.1} parent=1 // pred_check
      _
    $region15: #{tpu_custom_call.1} parent=1 // pred_check_branch
      %41 = sbr.rel (0) target = $region17
    $region16: #{tpu_custom_call.1} parent=1 // pred_region
      %43 = dma.done [#allocation6], 1536
    $region17: #{tpu_custom_call.1} parent=1 // pred_fallthru
      _
    %v45 = vld [vmem:[#allocation2] sm:$0xff]
    %v46 = vld [vmem:[#allocation2 + $0x8] sm:$0xff]
    %v47 = vld [vmem:[#allocation5] sm:$0xf]
    %v48 = vld [vmem:[#allocation5 + $0x4] sm:$0xf]
    %v49 = vld [vmem:[#allocation5 + $0x8] sm:$0xf]
    %v50 = vld [vmem:[#allocation5 + $0xc] sm:$0xf]
    %v51 = vld [vmem:[#allocation5 + $0x10] sm:$0xf]
    %v52 = vld [vmem:[#allocation5 + $0x14] sm:$0xf]
    %v53 = vld [vmem:[#allocation5 + $0x18] sm:$0xf]
    %v54 = vld [vmem:[#allocation5 + $0x1c] sm:$0xf]
    %v55 = vld [vmem:[#allocation5 + $0x20] sm:$0xf]
    %v56 = vld [vmem:[#allocation5 + $0x24] sm:$0xf]
    %v57 = vld [vmem:[#allocation5 + $0x28] sm:$0xf]
    %v58 = vld [vmem:[#allocation5 + $0x2c] sm:$0xf]
    %v59 = vld [vmem:[#allocation5 + $0x30] sm:$0xf]
    %v60 = vld [vmem:[#allocation5 + $0x34] sm:$0xf]
    %v61 = vld [vmem:[#allocation5 + $0x38] sm:$0xf]
    %v62 = vld [vmem:[#allocation5 + $0x3c] sm:$0xf]
    %v63 = vld [vmem:[#allocation5 + $0x40] sm:$0xf]
    %v64 = vld [vmem:[#allocation5 + $0x44] sm:$0xf]
    %v65 = vld [vmem:[#allocation5 + $0x48] sm:$0xf]
    %v66 = vld [vmem:[#allocation5 + $0x4c] sm:$0xf]
    %v67 = vld [vmem:[#allocation5 + $0x50] sm:$0xf]
    %v68 = vunpack.c.l.bf16 %v67
    %v69 = vld [vmem:[#allocation5 + $0x58] sm:$0xf]
    %v70 = vld [vmem:[#allocation5 + $0x5c] sm:$0xf]
    %v71 = vunpack.c.l.bf16 %v69
    %v72 = vunpack.c.l.bf16 %v70
    %v73 = vpack.c.bf16 %v46, %v45
    %v74 = vperm.slane %v68, 0
    %v79 = vunpack.c.l.b16 %v47
    %v80 = vunpack.c.l.b16 %v48
    %v81 = vunpack.c.l.b16 %v49
    %v82 = vunpack.c.l.b16 %v50
    %v83 = vpack.c.b16 %v80, %v79
    %v84 = vpack.c.b16 %v82, %v81
    %vm87 = vcmask 261120
    %v89 = vsel %vm87, %v73, 0
    %91 = vmatpush.bf16.msra.mxu0 0
    %92 = vmatpush.bf16.msra.mxu0 0
    %93 = vmatpush.bf16.msra.mxu0 0
    %94 = vmatpush.bf16.msra.mxu0 0
    %95 = vmatpush.bf16.msra.mxu0 0
    %96 = vmatpush.bf16.msra.mxu0 0
    %97 = vmatpush.bf16.msra.mxu0 %v84
    %98 = vmatpush.bf16.msra.mxu0 %v83
    %99 = vmatmul.bf16.gmra.mxu0 %v89
    %v100 = vpop.f32.mrf.mxu0
    %v101 = vadd.f32 %v74, %v100
    %v102 = vpop.f32.mrf.mxu0
    %v103 = vadd.f32 %v74, %v102
    %104 = vdwg.mxu0
    %v105 = vpack.c.bf16 %v101, %v101
    %v106 = vpack.c.bf16 %v103, %v103
    %v109 = vunpack.c.l.b16 %v105
    %v110 = vunpack.c.l.b16 %v106
    %v111 = vpack.c.b16 %v110, %v109
    %112 = vrot.lane.b32.xlu0 %v111, 96
    %v113 = vpop.permute.xlu0 %112
    %vm114 = vcmask 64512
    %v116 = vsel %vm114, %v111, 0
    %v119 = vsel %vm114, %v113, 0
    %121 = vmatpush.bf16.xpose.msra.mxu0 0
    %122 = vmatpush.bf16.xpose.msra.mxu0 0
    %123 = vmatpush.bf16.xpose.msra.mxu0 0
    %124 = vmatpush.bf16.xpose.msra.mxu0 0
    %125 = vmatpush.bf16.xpose.msra.mxu0 0
    %126 = vmatpush.bf16.xpose.msra.mxu0 0
    %127 = vmatpush.bf16.xpose.msra.mxu0 0
    %128 = vmatpush.bf16.xpose.msra.mxu0 %v119
    %129 = vmatmul.bf16.gmra.mxu0 %v116
    %v130 = vpop.f32.mrf.mxu0
    %v131 = vadd.f32 %v71, %v130
    %v132 = vpop.f32.mrf.mxu0
    %v133 = vadd.f32 %v72, %v132
    %134 = vdwg.mxu0
    %vm135 = vcmask 130048
    %v136 = vsel %vm135, %v131, -inf
    %137 = vmax.xlane.f32.xlu0 %v136
    %v138 = vpop.xlane.xlu0 %137
    %v139 = vsel %vm135, %v133, -inf
    %140 = vmax.xlane.f32.xlu0 %v139
    %v141 = vpop.xlane.xlu0 %140
    %v142 = vsub.f32 %v131, %v138
    %v143 = vsub.f32 %v133, %v141
    %v144 = vmul.f32 %v142, 1.442695
    %v145 = vpow.pop %v144
    %v146 = vmul.f32 %v143, 1.442695
    %v147 = vpow.pop %v146
    %v148 = vsel %vm135, %v145, 0.0
    %149 = vadd.xlane.f32.xlu0 %v148
    %v150 = vpop.xlane.xlu0 %149
    %v151 = vsel %vm135, %v147, 0.0
    %152 = vadd.xlane.f32.xlu0 %v151
    %v153 = vpop.xlane.xlu0 %152
    %v154 = vrcp.pop %v150
    %v155 = vrcp.pop %v153
    %v156 = vmul.f32 %v145, %v154
    %v157 = vmul.f32 %v147, %v155
    %v158 = vpack.c.bf16 %v157, %v156
    %159 = vrot.lane.b32.xlu0 %v111, 64
    %v160 = vpop.permute.xlu0 %159
    %v163 = vsel %vm135, %v158, 0
    %165 = vmatpush.bf16.msra.mxu0 0
    %166 = vmatpush.bf16.msra.mxu0 0
    %167 = vmatpush.bf16.msra.mxu0 0
    %168 = vmatpush.bf16.msra.mxu0 0
    %169 = vmatpush.bf16.msra.mxu0 0
    %170 = vmatpush.bf16.msra.mxu0 0
    %171 = vmatpush.bf16.msra.mxu0 0
    %172 = vmatpush.bf16.msra.mxu0 %v160
    %173 = vmatmul.bf16.gmra.mxu0 %v163
    %v174 = vpop.f32.mrf.mxu0
    %v175 = vadd.f32 0.0, %v174
    %v176 = vpop.f32.mrf.mxu0
    %v177 = vadd.f32 0.0, %v176
    %178 = vdwg.mxu0
    %v179 = vpack.c.bf16 %v177, %v175
    %180 = vrot.lane.b32.xlu0 %v111, 120
    %v181 = vpop.permute.xlu0 %180
    %182 = vrot.lane.b32.xlu0 %v111, 88
    %v183 = vpop.permute.xlu0 %182
    %v185 = vsel %vm114, %v181, 0
    %v188 = vsel %vm114, %v183, 0
    %190 = vmatpush.bf16.xpose.msra.mxu0 0
    %191 = vmatpush.bf16.xpose.msra.mxu0 0
    %192 = vmatpush.bf16.xpose.msra.mxu0 0
    %193 = vmatpush.bf16.xpose.msra.mxu0 0
    %194 = vmatpush.bf16.xpose.msra.mxu0 0
    %195 = vmatpush.bf16.xpose.msra.mxu0 0
    %196 = vmatpush.bf16.xpose.msra.mxu0 0
    %197 = vmatpush.bf16.xpose.msra.mxu0 %v188
    %198 = vmatmul.bf16.gmra.mxu0 %v185
    %v199 = vpop.f32.mrf.mxu0
    %v200 = vadd.f32 %v71, %v199
    %v201 = vpop.f32.mrf.mxu0
    %v202 = vadd.f32 %v72, %v201
    %203 = vdwg.mxu0
    %v204 = vsel %vm135, %v200, -inf
    %205 = vmax.xlane.f32.xlu0 %v204
    %v206 = vpop.xlane.xlu0 %205
    %v207 = vsel %vm135, %v202, -inf
    %208 = vmax.xlane.f32.xlu0 %v207
    %v209 = vpop.xlane.xlu0 %208
    %v210 = vsub.f32 %v200, %v206
    %v211 = vsub.f32 %v202, %v209
    %v212 = vmul.f32 %v210, 1.442695
    %v213 = vpow.pop %v212
    %v214 = vmul.f32 %v211, 1.442695
    %v215 = vpow.pop %v214
    %v216 = vsel %vm135, %v213, 0.0
    %217 = vadd.xlane.f32.xlu0 %v216
    %v218 = vpop.xlane.xlu0 %217
    %v219 = vsel %vm135, %v215, 0.0
    %220 = vadd.xlane.f32.xlu0 %v219
    %v221 = vpop.xlane.xlu0 %220
    %v222 = vrcp.pop %v218
    %v223 = vrcp.pop %v221
    %v224 = vmul.f32 %v213, %v222
    %v225 = vmul.f32 %v215, %v223
    %v226 = vpack.c.bf16 %v225, %v224
    %227 = vrot.lane.b32.xlu0 %v111, 56
    %v228 = vpop.permute.xlu0 %227
    %v231 = vsel %vm135, %v226, 0
    %233 = vmatpush.bf16.msra.mxu0 0
    %234 = vmatpush.bf16.msra.mxu0 0
    %235 = vmatpush.bf16.msra.mxu0 0
    %236 = vmatpush.bf16.msra.mxu0 0
    %237 = vmatpush.bf16.msra.mxu0 0
    %238 = vmatpush.bf16.msra.mxu0 0
    %239 = vmatpush.bf16.msra.mxu0 0
    %240 = vmatpush.bf16.msra.mxu0 %v228
    %241 = vmatmul.bf16.gmra.mxu0 %v231
    %v242 = vpop.f32.mrf.mxu0
    %v243 = vadd.f32 0.0, %v242
    %v244 = vpop.f32.mrf.mxu0
    %v245 = vadd.f32 0.0, %v244
    %246 = vdwg.mxu0
    %v247 = vpack.c.bf16 %v245, %v243
    %v249 = vsel %vm114, %v247, 0
    %vm251 = vcmask 1043456
    %v253 = vsel %vm251, %v52, 0
    %255 = vmatpush.bf16.msra.mxu0 0
    %256 = vmatpush.bf16.msra.mxu0 0
    %257 = vmatpush.bf16.msra.mxu0 0
    %258 = vmatpush.bf16.msra.mxu0 0
    %259 = vmatpush.bf16.msra.mxu0 0
    %260 = vmatpush.bf16.msra.mxu0 0
    %261 = vmatpush.bf16.msra.mxu0 0
    %262 = vmatpush.bf16.msra.mxu0 %v253
    %263 = vmatmul.bf16.gmra.mxu0 %v249
    %v264 = vpop.f32.mrf.mxu0
    %v265 = vadd.f32 0.0, %v264
    %v266 = vpop.f32.mrf.mxu0
    %v267 = vadd.f32 0.0, %v266
    %268 = vdwg.mxu0
    %v270 = vsel %vm114, %v179, 0
    %v273 = vsel %vm251, %v51, 0
    %275 = vmatpush.bf16.msra.mxu0 0
    %276 = vmatpush.bf16.msra.mxu0 0
    %277 = vmatpush.bf16.msra.mxu0 0
    %278 = vmatpush.bf16.msra.mxu0 0
    %279 = vmatpush.bf16.msra.mxu0 0
    %280 = vmatpush.bf16.msra.mxu0 0
    %281 = vmatpush.bf16.msra.mxu0 0
    %282 = vmatpush.bf16.msra.mxu0 %v273
    %283 = vmatmul.bf16.gmra.mxu0 %v270
    %v284 = vpop.f32.mrf.mxu0
    %v285 = vadd.f32 %v265, %v284
    %v286 = vpop.f32.mrf.mxu0
    %v287 = vadd.f32 %v267, %v286
    %288 = vdwg.mxu0
    %289 = vrot.lane.b32.xlu0 %v111, 112
    %v290 = vpop.permute.xlu0 %289
    %291 = vrot.lane.b32.xlu0 %v111, 80
    %v292 = vpop.permute.xlu0 %291
    %v294 = vsel %vm114, %v290, 0
    %v297 = vsel %vm114, %v292, 0
    %299 = vmatpush.bf16.xpose.msra.mxu0 0
    %300 = vmatpush.bf16.xpose.msra.mxu0 0
    %301 = vmatpush.bf16.xpose.msra.mxu0 0
    %302 = vmatpush.bf16.xpose.msra.mxu0 0
    %303 = vmatpush.bf16.xpose.msra.mxu0 0
    %304 = vmatpush.bf16.xpose.msra.mxu0 0
    %305 = vmatpush.bf16.xpose.msra.mxu0 0
    %306 = vmatpush.bf16.xpose.msra.mxu0 %v297
    %307 = vmatmul.bf16.gmra.mxu0 %v294
    %v308 = vpop.f32.mrf.mxu0
    %v309 = vadd.f32 %v71, %v308
    %v310 = vpop.f32.mrf.mxu0
    %v311 = vadd.f32 %v72, %v310
    %312 = vdwg.mxu0
    %v313 = vsel %vm135, %v309, -inf
    %314 = vmax.xlane.f32.xlu0 %v313
    %v315 = vpop.xlane.xlu0 %314
    %v316 = vsel %vm135, %v311, -inf
    %317 = vmax.xlane.f32.xlu0 %v316
    %v318 = vpop.xlane.xlu0 %317
    %v319 = vsub.f32 %v309, %v315
    %v320 = vsub.f32 %v311, %v318
    %v321 = vmul.f32 %v319, 1.442695
    %v322 = vpow.pop %v321
    %v323 = vmul.f32 %v320, 1.442695
    %v324 = vpow.pop %v323
    %v325 = vsel %vm135, %v322, 0.0
    %326 = vadd.xlane.f32.xlu0 %v325
    %v327 = vpop.xlane.xlu0 %326
    %v328 = vsel %vm135, %v324, 0.0
    %329 = vadd.xlane.f32.xlu0 %v328
    %v330 = vpop.xlane.xlu0 %329
    %v331 = vrcp.pop %v327
    %v332 = vrcp.pop %v330
    %v333 = vmul.f32 %v322, %v331
    %v334 = vmul.f32 %v324, %v332
    %v335 = vpack.c.bf16 %v334, %v333
    %336 = vrot.lane.b32.xlu0 %v111, 48
    %v337 = vpop.permute.xlu0 %336
    %v340 = vsel %vm135, %v335, 0
    %342 = vmatpush.bf16.msra.mxu0 0
    %343 = vmatpush.bf16.msra.mxu0 0
    %344 = vmatpush.bf16.msra.mxu0 0
    %345 = vmatpush.bf16.msra.mxu0 0
    %346 = vmatpush.bf16.msra.mxu0 0
    %347 = vmatpush.bf16.msra.mxu0 0
    %348 = vmatpush.bf16.msra.mxu0 0
    %349 = vmatpush.bf16.msra.mxu0 %v337
    %350 = vmatmul.bf16.gmra.mxu0 %v340
    %v351 = vpop.f32.mrf.mxu0
    %v352 = vadd.f32 0.0, %v351
    %v353 = vpop.f32.mrf.mxu0
    %v354 = vadd.f32 0.0, %v353
    %355 = vdwg.mxu0
    %v356 = vpack.c.bf16 %v354, %v352
    %v358 = vsel %vm114, %v356, 0
    %v361 = vsel %vm251, %v53, 0
    %363 = vmatpush.bf16.msra.mxu0 0
    %364 = vmatpush.bf16.msra.mxu0 0
    %365 = vmatpush.bf16.msra.mxu0 0
    %366 = vmatpush.bf16.msra.mxu0 0
    %367 = vmatpush.bf16.msra.mxu0 0
    %368 = vmatpush.bf16.msra.mxu0 0
    %369 = vmatpush.bf16.msra.mxu0 0
    %370 = vmatpush.bf16.msra.mxu0 %v361
    %371 = vmatmul.bf16.gmra.mxu0 %v358
    %v372 = vpop.f32.mrf.mxu0
    %v373 = vadd.f32 0.0, %v372
    %v374 = vpop.f32.mrf.mxu0
    %v375 = vadd.f32 0.0, %v374
    %376 = vdwg.mxu0
    %v377 = vadd.f32 %v285, %v373
    %v378 = vadd.f32 %v287, %v375
    %379 = vrot.lane.b32.xlu0 %v111, 104
    %v380 = vpop.permute.xlu0 %379
    %381 = vrot.lane.b32.xlu0 %v111, 72
    %v382 = vpop.permute.xlu0 %381
    %v384 = vsel %vm114, %v380, 0
    %v387 = vsel %vm114, %v382, 0
    %389 = vmatpush.bf16.xpose.msra.mxu0 0
    %390 = vmatpush.bf16.xpose.msra.mxu0 0
    %391 = vmatpush.bf16.xpose.msra.mxu0 0
    %392 = vmatpush.bf16.xpose.msra.mxu0 0
    %393 = vmatpush.bf16.xpose.msra.mxu0 0
    %394 = vmatpush.bf16.xpose.msra.mxu0 0
    %395 = vmatpush.bf16.xpose.msra.mxu0 0
    %396 = vmatpush.bf16.xpose.msra.mxu0 %v387
    %397 = vmatmul.bf16.gmra.mxu0 %v384
    %v398 = vpop.f32.mrf.mxu0
    %v399 = vadd.f32 %v71, %v398
    %v400 = vpop.f32.mrf.mxu0
    %v401 = vadd.f32 %v72, %v400
    %402 = vdwg.mxu0
    %v403 = vsel %vm135, %v399, -inf
    %404 = vmax.xlane.f32.xlu0 %v403
    %v405 = vpop.xlane.xlu0 %404
    %v406 = vsel %vm135, %v401, -inf
    %407 = vmax.xlane.f32.xlu0 %v406
    %v408 = vpop.xlane.xlu0 %407
    %v409 = vsub.f32 %v399, %v405
    %v410 = vsub.f32 %v401, %v408
    %v411 = vmul.f32 %v409, 1.442695
    %v412 = vpow.pop %v411
    %v413 = vmul.f32 %v410, 1.442695
    %v414 = vpow.pop %v413
    %v415 = vsel %vm135, %v412, 0.0
    %416 = vadd.xlane.f32.xlu0 %v415
    %v417 = vpop.xlane.xlu0 %416
    %v418 = vsel %vm135, %v414, 0.0
    %419 = vadd.xlane.f32.xlu0 %v418
    %v420 = vpop.xlane.xlu0 %419
    %v421 = vrcp.pop %v417
    %v422 = vrcp.pop %v420
    %v423 = vmul.f32 %v412, %v421
    %v424 = vmul.f32 %v414, %v422
    %v425 = vpack.c.bf16 %v424, %v423
    %426 = vrot.lane.b32.xlu0 %v111, 40
    %v427 = vpop.permute.xlu0 %426
    %v430 = vsel %vm135, %v425, 0
    %432 = vmatpush.bf16.msra.mxu0 0
    %433 = vmatpush.bf16.msra.mxu0 0
    %434 = vmatpush.bf16.msra.mxu0 0
    %435 = vmatpush.bf16.msra.mxu0 0
    %436 = vmatpush.bf16.msra.mxu0 0
    %437 = vmatpush.bf16.msra.mxu0 0
    %438 = vmatpush.bf16.msra.mxu0 0
    %439 = vmatpush.bf16.msra.mxu0 %v427
    %440 = vmatmul.bf16.gmra.mxu0 %v430
    %v441 = vpop.f32.mrf.mxu0
    %v442 = vadd.f32 0.0, %v441
    %v443 = vpop.f32.mrf.mxu0
    %v444 = vadd.f32 0.0, %v443
    %445 = vdwg.mxu0
    %v446 = vpack.c.bf16 %v444, %v442
    %v448 = vsel %vm114, %v446, 0
    %v451 = vsel %vm251, %v54, 0
    %453 = vmatpush.bf16.msra.mxu0 0
    %454 = vmatpush.bf16.msra.mxu0 0
    %455 = vmatpush.bf16.msra.mxu0 0
    %456 = vmatpush.bf16.msra.mxu0 0
    %457 = vmatpush.bf16.msra.mxu0 0
    %458 = vmatpush.bf16.msra.mxu0 0
    %459 = vmatpush.bf16.msra.mxu0 0
    %460 = vmatpush.bf16.msra.mxu0 %v451
    %461 = vmatmul.bf16.gmra.mxu0 %v448
    %v462 = vpop.f32.mrf.mxu0
    %v463 = vadd.f32 0.0, %v462
    %v464 = vpop.f32.mrf.mxu0
    %v465 = vadd.f32 0.0, %v464
    %466 = vdwg.mxu0
    %v467 = vadd.f32 %v377, %v463
    %v468 = vadd.f32 %v378, %v465
    %v469 = vperm.slane %v68, 2
    %v470 = vadd.f32 %v467, %v469
    %v471 = vadd.f32 %v468, %v469
    %v472 = vadd.f32 %v45, %v470
    %v473 = vadd.f32 %v46, %v471
    %v474 = vsel %vm87, %v472, 0.0
    %475 = vadd.xlane.f32.xlu0 %v474
    %v476 = vpop.xlane.xlu0 %475
    %v477 = vsel %vm87, %v473, 0.0
    %478 = vadd.xlane.f32.xlu0 %v477
    %v479 = vpop.xlane.xlu0 %478
    %v480 = vrcp.pop 32.0
    %v481 = vmul.f32 32.0, %v480
    %v482 = vsub.f32 1.0, %v481
    %v483 = vmul.f32 %v480, %v482
    %v484 = vadd.f32 %v480, %v483
    %vm485 = vweird.f32 %v480
    %v486 = vsel %vm485, %v480, %v484
    %v487 = vmul.f32 %v476, %v486
    %v488 = vmul.f32 %v479, %v486
    %v489 = vsub.f32 %v472, %v487
    %v490 = vsub.f32 %v473, %v488
    %v491 = vmul.f32 %v489, %v489
    %v492 = vmul.f32 %v490, %v490
    %v493 = vsel %vm87, %v491, 0.0
    %494 = vadd.xlane.f32.xlu0 %v493
    %v495 = vpop.xlane.xlu0 %494
    %v496 = vsel %vm87, %v492, 0.0
    %497 = vadd.xlane.f32.xlu0 %v496
    %v498 = vpop.xlane.xlu0 %497
    %v499 = vmul.f32 %v495, %v486
    %v500 = vmul.f32 %v498, %v486
    %v501 = vadd.f32 %v499, 1e-05
    %v502 = vadd.f32 %v500, 1e-05
    %v503 = vrsqrt.pop %v501
    %v504 = vmul.f32 %v503, %v501
    %v505 = vmul.f32 %v504, %v503
    %v506 = vmul.f32 0.5, %v505
    %v507 = vsub.f32 1.5, %v506
    %v508 = vmul.f32 %v503, %v507
    %vm509 = vweird.f32 %v501
    %vm510 = vweird.f32 %v503
    %vm511 = vmor %vm509, %vm510
    %v512 = vsel %vm511, %v503, %v508
    %v513 = vrsqrt.pop %v502
    %v514 = vmul.f32 %v513, %v502
    %v515 = vmul.f32 %v514, %v513
    %v516 = vmul.f32 0.5, %v515
    %v517 = vsub.f32 1.5, %v516
    %v518 = vmul.f32 %v513, %v517
    %vm519 = vweird.f32 %v502
    %vm520 = vweird.f32 %v513
    %vm521 = vmor %vm519, %vm520
    %v522 = vsel %vm521, %v513, %v518
    %v523 = vmul.f32 %v489, %v512
    %v524 = vmul.f32 %v490, %v522
    %v525 = vperm.slane %v68, 3
    %v526 = vmul.f32 %v523, %v525
    %v527 = vmul.f32 %v524, %v525
    %v528 = vperm.slane %v68, 4
    %v529 = vadd.f32 %v526, %v528
    %v530 = vadd.f32 %v527, %v528
    %v531 = vpack.c.bf16 %v530, %v529
    %v532 = vperm.slane %v68, 1
    %v537 = vunpack.c.l.b16 %v55
    %v538 = vunpack.c.l.b16 %v56
    %v539 = vunpack.c.l.b16 %v57
    %v540 = vunpack.c.l.b16 %v58
    %v541 = vpack.c.b16 %v538, %v537
    %v542 = vpack.c.b16 %v540, %v539
    %v546 = vsel %vm87, %v531, 0
    %548 = vmatpush.bf16.msra.mxu0 0
    %549 = vmatpush.bf16.msra.mxu0 0
    %550 = vmatpush.bf16.msra.mxu0 0
    %551 = vmatpush.bf16.msra.mxu0 0
    %552 = vmatpush.bf16.msra.mxu0 0
    %553 = vmatpush.bf16.msra.mxu0 0
    %554 = vmatpush.bf16.msra.mxu0 %v542
    %555 = vmatpush.bf16.msra.mxu0 %v541
    %556 = vmatmul.bf16.gmra.mxu0 %v546
    %v557 = vpop.f32.mrf.mxu0
    %v558 = vadd.f32 %v532, %v557
    %v559 = vpop.f32.mrf.mxu0
    %v560 = vadd.f32 %v532, %v559
    %561 = vdwg.mxu0
    %v562 = vmax.f32 %v558, 0.0
    %v563 = vmax.f32 %v560, 0.0
    %v564 = vpack.c.bf16 %v563, %v562
    %v565 = vperm.slane %v68, 5
    %v574 = vunpack.c.l.b16 %v59
    %v575 = vunpack.c.l.b16 %v60
    %v576 = vunpack.c.l.b16 %v61
    %v577 = vunpack.c.l.b16 %v62
    %v578 = vunpack.c.l.b16 %v63
    %v579 = vunpack.c.l.b16 %v64
    %v580 = vunpack.c.l.b16 %v65
    %v581 = vunpack.c.l.b16 %v66
    %v582 = vpack.c.b16 %v575, %v574
    %v583 = vpack.c.b16 %v577, %v576
    %v584 = vpack.c.b16 %v579, %v578
    %v585 = vpack.c.b16 %v581, %v580
    %vm590 = vcmask 523264
    %v592 = vsel %vm590, %v564, 0
    %594 = vmatpush.bf16.msra.mxu0 0
    %595 = vmatpush.bf16.msra.mxu0 0
    %596 = vmatpush.bf16.msra.mxu0 0
    %597 = vmatpush.bf16.msra.mxu0 0
    %598 = vmatpush.bf16.msra.mxu0 %v585
    %599 = vmatpush.bf16.msra.mxu0 %v584
    %600 = vmatpush.bf16.msra.mxu0 %v583
    %601 = vmatpush.bf16.msra.mxu0 %v582
    %602 = vmatmul.bf16.gmra.mxu0 %v592
    %v603 = vpop.f32.mrf.mxu0
    %v604 = vadd.f32 %v565, %v603
    %v605 = vpop.f32.mrf.mxu0
    %v606 = vadd.f32 %v565, %v605
    %607 = vdwg.mxu0
    %v608 = vadd.f32 %v529, %v604
    %v609 = vadd.f32 %v530, %v606
    %v610 = vsel %vm87, %v608, 0.0
    %611 = vadd.xlane.f32.xlu0 %v610
    %v612 = vpop.xlane.xlu0 %611
    %v613 = vsel %vm87, %v609, 0.0
    %614 = vadd.xlane.f32.xlu0 %v613
    %v615 = vpop.xlane.xlu0 %614
    %v616 = vmul.f32 %v612, %v486
    %v617 = vmul.f32 %v615, %v486
    %v618 = vsub.f32 %v608, %v616
    %v619 = vsub.f32 %v609, %v617
    %v620 = vmul.f32 %v618, %v618
    %v621 = vmul.f32 %v619, %v619
    %v622 = vsel %vm87, %v620, 0.0
    %623 = vadd.xlane.f32.xlu0 %v622
    %v624 = vpop.xlane.xlu0 %623
    %v625 = vsel %vm87, %v621, 0.0
    %626 = vadd.xlane.f32.xlu0 %v625
    %v627 = vpop.xlane.xlu0 %626
    %v628 = vmul.f32 %v624, %v486
    %v629 = vmul.f32 %v627, %v486
    %v630 = vadd.f32 %v628, 1e-05
    %v631 = vadd.f32 %v629, 1e-05
    %v632 = vrsqrt.pop %v630
    %v633 = vmul.f32 %v632, %v630
    %v634 = vmul.f32 %v633, %v632
    %v635 = vmul.f32 0.5, %v634
    %v636 = vsub.f32 1.5, %v635
    %v637 = vmul.f32 %v632, %v636
    %vm638 = vweird.f32 %v630
    %vm639 = vweird.f32 %v632
    %vm640 = vmor %vm638, %vm639
    %v641 = vsel %vm640, %v632, %v637
    %v642 = vrsqrt.pop %v631
    %v643 = vmul.f32 %v642, %v631
    %v644 = vmul.f32 %v643, %v642
    %v645 = vmul.f32 0.5, %v644
    %v646 = vsub.f32 1.5, %v645
    %v647 = vmul.f32 %v642, %v646
    %vm648 = vweird.f32 %v631
    %vm649 = vweird.f32 %v642
    %vm650 = vmor %vm648, %vm649
    %v651 = vsel %vm650, %v642, %v647
    %v652 = vmul.f32 %v618, %v641
    %v653 = vmul.f32 %v619, %v651
    %v654 = vperm.slane %v68, 6
    %v655 = vmul.f32 %v652, %v654
    %v656 = vmul.f32 %v653, %v654
    %v657 = vperm.slane %v68, 7
    %v658 = vadd.f32 %v655, %v657
    %v659 = vadd.f32 %v656, %v657
    %660 = vst.msk [vmem:[#allocation7] sm:$0xff] %vm87, %v658
    %661 = vst.msk [vmem:[#allocation7 + $0x8] sm:$0xff] %vm87, %v659
    // Predicated region
    $region18: #{tpu_custom_call.1} parent=1 // pred_check
      _
    $region19: #{tpu_custom_call.1} parent=1 // pred_check_branch
      %663 = sbr.rel (0) target = $region21
    $region20: #{tpu_custom_call.1} parent=1 // pred_region
      %665 = vsyncadd [#allocation4], 0
      %s666 = sshll.u32 [#allocation7], 4
      %s667 = int_to_ptr.vmem [resolvable:$true] %s666
      %s668 = sshll.u32 %s2, 4
      %s669 = int_to_ptr.hbm [resolvable:$true] %s668
      %674 = dma.vmem_to_hbm [thread:$0]  %s667, 256, %s669, [#allocation4], 128, 128, 8
    $region21: #{tpu_custom_call.1} parent=1 // pred_fallthru
      _
    // Predicated region
    $region22: #{tpu_custom_call.1} parent=1 // pred_check
      _
    $region23: #{tpu_custom_call.1} parent=1 // pred_check_branch
      %676 = sbr.rel (0) target = $region25
    $region24: #{tpu_custom_call.1} parent=1 // pred_region
      %678 = dma.done [#allocation4], 256
    $region25: #{tpu_custom_call.1} parent=1 // pred_fallthru
      _
    %679 = vsyncpa [#allocation3], 1
    %680 = vsyncpa [#allocation6], 1
    %681 = vsyncpa [#allocation4], 1

</llo_original>
